<compile_context>
chip_gen: v5e
topology: v5e:2x2
jax: 0.10.0
libtpu: 0.0.40
codegen_flags: <defaults>
</compile_context>

<pallas_src>
import jax
import jax.numpy as jnp
from jax import lax
from jax.experimental import pallas as pl
from jax.experimental.pallas import tpu as pltpu


def _round_up(a, b):
    return ((a + b - 1) // b) * b


def _round_down(a, b):
    return (a // b) * b


def _linear_kernel(x_ref, w_ref, b_ref, o_ref):
    # x_ref: (TM, d_model); w_ref: (c_pad, d_model); b_ref: (c_pad, 1)
    # o_ref: (c_pad, TM)  -- lane-dense output (lanes carry the row tile).
    acc = lax.dot_general(
        w_ref[...], x_ref[...],
        dimension_numbers=(((1,), (1,)), ((), ())),   # contract d_model on both
        preferred_element_type=jnp.float32,
    )                                                 # -> (c_pad, TM) f32
    o_ref[...] = (acc + b_ref[...]).astype(o_ref.dtype)


def decoder_forward(x, weight, bias, *, compute_dtype=None):
    """out = x @ weight.T + bias  (torch.nn.Linear semantics).

    x: (N, L, d_model); weight: (c_out, d_model); bias: (c_out,)
    compute_dtype: optionally cast x/weight (e.g. jnp.bfloat16) to halve input
      HBM traffic; accumulation stays f32 and the output keeps x.dtype.
    """
    N, L, d_model = x.shape
    c_out = weight.shape[0]
    M = N * L
    out_dtype = x.dtype

    x2d = x.reshape(M, d_model)
    if compute_dtype is not None:
        x2d = x2d.astype(compute_dtype)
        weight = weight.astype(compute_dtype)
    in_itemsize = jnp.dtype(x2d.dtype).itemsize
    out_itemsize = jnp.dtype(out_dtype).itemsize

    # Pad c_out to a full sublane group (8): output block is full (8,128) tiles.
    c_pad = _round_up(c_out, 8)
    w_p = jnp.pad(weight, ((0, c_pad - c_out), (0, 0)))
    b_p = jnp.pad(bias.astype(jnp.float32), (0, c_pad - c_out)).reshape(c_pad, 1)

    # ---- Row-tile sizing --------------------------------------------------
    # Lane-padded VMEM bytes per row: a (TM, d_model) block occupies
    # TM * round_up(d_model, 128) elements; the (c_pad, TM) out block adds c_pad.
    bytes_per_row = _round_up(d_model, 128) * in_itemsize + c_pad * out_itemsize
    buf_budget = 36 << 20                      # 2x(x tile) + 2x(out tile) < ~36 MiB (v7x-safe)
    tm_budget = max(128, (buf_budget // 2) // bytes_per_row)
    # Target ~2 MiB of real x HBM bytes per grid step (amortize per-step overhead).
    tm_target = max(128, (2 << 20) // (d_model * in_itemsize))
    TM = max(128, _round_down(min(tm_budget, tm_target), 128))
    # Keep >= 2 grid steps when there is enough work so the "parallel" row axis
    # shards across both TensorCores on v7x.
    if M > 128:
        TM = min(TM, _round_up(pl.cdiv(M, 2), 128))
    if TM >= M:
        TM = M                                 # tiny input: single full-array block
    grid_m = pl.cdiv(M, TM)

    cost = pl.CostEstimate(
        flops=2 * M * d_model * c_pad,
        transcendentals=0,
        bytes_accessed=(M * d_model * in_itemsize          # x
                        + c_pad * d_model * in_itemsize    # W
                        + c_pad * 4                        # bias
                        + c_pad * M * out_itemsize),       # out
    )

    out_t = pl.pallas_call(
        _linear_kernel,
        out_shape=jax.ShapeDtypeStruct((c_pad, M), out_dtype),
        grid_spec=pl.GridSpec(
            grid=(grid_m,),
            in_specs=[
                pl.BlockSpec((TM, d_model), lambda i: (i, 0)),      # x row tile
                pl.BlockSpec((c_pad, d_model), lambda i: (0, 0)),   # resident W
                pl.BlockSpec((c_pad, 1), lambda i: (0, 0)),         # resident bias
            ],
            out_specs=pl.BlockSpec((c_pad, TM), lambda i: (0, i)),
        ),
        compiler_params=pltpu.CompilerParams(
            dimension_semantics=("parallel",),   # shard row tiles across TCs (v7x)
            vmem_limit_bytes=48 << 20,           # <= ~48 MiB is safe on v7x; fine on v5e/v6e
        ),
        cost_estimate=cost,
    )(x2d, w_p, b_p)

    # Slice the valid c_out rows first, then transpose only the (c_out, M) slab.
    out2d = out_t[:c_out, :].T                   # (M, c_out)
    return out2d.reshape(N, L, c_out)


if __name__ == "__main__":
    # Small shapes consistent with the module: batch=2, seq=8, d_model=32, c_out=4
    N, L, d_model, c_out = 2, 8, 32, 4

    key = jax.random.PRNGKey(0)
    kx, kw, kb = jax.random.split(key, 3)

    x = jax.random.normal(kx, (N, L, d_model), dtype=jnp.float32)
    # Deterministic nn.Linear-style init: U(-1/sqrt(d_model), 1/sqrt(d_model))
    bound = 1.0 / (d_model ** 0.5)
    weight = jax.random.uniform(kw, (c_out, d_model), jnp.float32, -bound, bound)
    bias = jax.random.uniform(kb, (c_out,), jnp.float32, -bound, bound)

    out = decoder_forward(x, weight, bias)
    out = jax.block_until_ready(out)
    ref = x @ weight.T + bias
    assert out.shape == (N, L, c_out)
    assert jnp.allclose(out, ref, atol=1e-5, rtol=1e-5)

    # Second check exercising the multi-tile (grid >= 2) path.
    N2, L2, d2, c2 = 2, 512, 64, 4
    k2x, k2w, k2b = jax.random.split(jax.random.PRNGKey(0), 3)
    x2 = jax.random.normal(k2x, (N2, L2, d2), dtype=jnp.float32)
    b2 = 1.0 / (d2 ** 0.5)
    w2 = jax.random.uniform(k2w, (c2, d2), jnp.float32, -b2, b2)
    bb2 = jax.random.uniform(k2b, (c2,), jnp.float32, -b2, b2)
    out2 = jax.block_until_ready(decoder_forward(x2, w2, bb2))
    ref2 = x2 @ w2.T + bb2
    assert out2.shape == (N2, L2, c2)
    assert jnp.allclose(out2, ref2, atol=1e-4, rtol=1e-4)

    print("KERNEL_OK")
</pallas_src>

<mosaic_0001>
module attributes {stable_mosaic.version = 11 : i64} {
  func.func @_linear_kernel(%arg0: i32, %arg1: memref<16x32xf32, #tpu.memory_space<vmem>>, %arg2: memref<8x32xf32, #tpu.memory_space<vmem>>, %arg3: memref<8x1xf32, #tpu.memory_space<vmem>>, %arg4: memref<8x16xf32, #tpu.memory_space<vmem>>) attributes {dimension_semantics = [#tpu.dimension_semantics<parallel>], iteration_bounds = array<i64: 1>, scalar_prefetch = 0 : i64, scratch_operands = 0 : i64, tpu.core_type = #tpu.core_type<tc>, window_params = [{transform_indices = @transform_0, window_bounds = array<i64: 16, 32>}, {pipeline_mode = #tpu.pipeline_mode<synchronous>, transform_indices = @transform_1, window_bounds = array<i64: 8, 32>}, {pipeline_mode = #tpu.pipeline_mode<synchronous>, transform_indices = @transform_2, window_bounds = array<i64: 8, 1>}, {transform_indices = @transform_3, window_bounds = array<i64: 8, 16>}]} {
    %c0 = arith.constant 0 : index
    %c0_0 = arith.constant 0 : index
    %0 = vector.load %arg2[%c0, %c0_0] : memref<8x32xf32, #tpu.memory_space<vmem>>, vector<8x32xf32>
    %c0_1 = arith.constant 0 : index
    %c0_2 = arith.constant 0 : index
    %1 = vector.load %arg1[%c0_1, %c0_2] : memref<16x32xf32, #tpu.memory_space<vmem>>, vector<16x32xf32>
    %cst = arith.constant dense<0.000000e+00> : vector<8x16xf32>
    %2 = tpu.matmul %0, %1, %cst {dimension_numbers = #tpu.dot_dimension_numbers<[1], [1], [0], [0], [0, 0, 1, 0], [], []>} : vector<8x32xf32>, vector<16x32xf32>, vector<8x16xf32> -> vector<8x16xf32>
    %c0_3 = arith.constant 0 : index
    %c0_4 = arith.constant 0 : index
    %3 = vector.load %arg3[%c0_3, %c0_4] : memref<8x1xf32, #tpu.memory_space<vmem>>, vector<8x1xf32>
    %4 = vector.broadcast %3 : vector<8x1xf32> to vector<8x16xf32>
    %5 = arith.addf %2, %4 : vector<8x16xf32>
    %c0_5 = arith.constant 0 : index
    %c0_6 = arith.constant 0 : index
    %6 = vector.load %arg4[%c0_5, %c0_6] : memref<8x16xf32, #tpu.memory_space<vmem>>, vector<8x16xf32>
    tpu.vector_store %arg4[%c0_5, %c0_6], %5 {strides = array<i32>} : memref<8x16xf32, #tpu.memory_space<vmem>>, vector<8x16xf32>,
    return
  }
  func.func @transform_0(%arg0: i32) -> (i32, i32) {
    %c0_i32 = arith.constant 0 : i32
    %c0_i32_0 = arith.constant 0 : i32
    return %arg0, %c0_i32 : i32, i32
  }
  func.func @transform_1(%arg0: i32) -> (i32, i32) {
    %c0_i32 = arith.constant 0 : i32
    %c0_i32_0 = arith.constant 0 : i32
    %c0_i32_1 = arith.constant 0 : i32
    return %c0_i32, %c0_i32_0 : i32, i32
  }
  func.func @transform_2(%arg0: i32) -> (i32, i32) {
    %c0_i32 = arith.constant 0 : i32
    %c0_i32_0 = arith.constant 0 : i32
    %c0_i32_1 = arith.constant 0 : i32
    return %c0_i32, %c0_i32_0 : i32, i32
  }
  func.func @transform_3(%arg0: i32) -> (i32, i32) {
    %c0_i32 = arith.constant 0 : i32
    %c0_i32_0 = arith.constant 0 : i32
    return %c0_i32, %arg0 : i32, i32
  }
}

</mosaic_0001>

<llo_original>
// kernel: tpu_custom_call.1
$region0: #{tpu_custom_call.1}
  #allocation0 [shape = 'u32[]', space=smem, size = 0x4, offset = 0x4, fixed_abs, tag = 'smem constant byte address 0x4 - core index']
  #allocation1 [shape = 'u32[72,128]{1,0:T(1,128)}', space=vmem, size = 0x9000, scoped, tag = 'internal scratch']
  %s0 = inlined_call_operand.hbm [shape: f32[16,32], index: 0, kind: input, shape index: {}]
  %s1 = inlined_call_operand.vmem [shape: f32[8,32], index: 1, kind: input, shape index: {}]
  %s2 = inlined_call_operand.vmem [shape: f32[8,1], index: 2, kind: input, shape index: {}]
  %s3 = inlined_call_operand.hbm [shape: f32[8,16], index: 3, kind: output, shape index: {}]
  %s4 = sld [smem:[#allocation0]]
  $region26: #{tpu_custom_call.1} parent=0
    _
  %s6 = ssub.s32 1, %s4
  %s7 = scalar_select 0, %s6, %s4
  $region1: #{tpu_custom_call.1} parent=0
    #allocation2 [shape = 'u8[8192]{0}', space=vmem, size = 0x2000, scoped, tag = 'input window, operand 0, single buffered']
    #allocation3 [shape = 's32[1]{0}', space=sflag, size = 0x4, scoped, tag = 'scoped memory for tpu_custom_call.1']
    #allocation4 [shape = 's32[1]{0}', space=sflag, size = 0x4, scoped, tag = 'scoped memory for tpu_custom_call.1']
    #allocation5 [shape = 'u8[4096]{0}', space=vmem, size = 0x1000, scoped, tag = 'output window, operand 0, single buffered']
    %8 = vsyncpa [#allocation3], 0
    %9 = vsyncpa [#allocation4], 0
    // Predicated region
    $region2: #{tpu_custom_call.1} parent=1 // pred_check
      _
    $region3: #{tpu_custom_call.1} parent=1 // pred_check_branch
      %11 = sbr.rel (0) target = $region5
    $region4: #{tpu_custom_call.1} parent=1 // pred_region
      %13 = vsyncadd [#allocation3], 0
      %s14 = sshll.u32 %s0, 4
      %s15 = int_to_ptr.hbm [resolvable:$true] %s14
      %s16 = sshll.u32 [#allocation2], 4
      %s17 = int_to_ptr.vmem [resolvable:$true] %s16
      %22 = dma.hbm_to_vmem [thread:$0]  %s15, 256, %s17, [#allocation3], 128, 128, 8
    $region5: #{tpu_custom_call.1} parent=1 // pred_fallthru
      _
    // Predicated region
    $region6: #{tpu_custom_call.1} parent=1 // pred_check
      _
    $region7: #{tpu_custom_call.1} parent=1 // pred_check_branch
      %24 = sbr.rel (0) target = $region9
    $region8: #{tpu_custom_call.1} parent=1 // pred_region
      _
    $region9: #{tpu_custom_call.1} parent=1 // pred_fallthru
      _
    // Predicated region
    $region10: #{tpu_custom_call.1} parent=1 // pred_check
      _
    $region11: #{tpu_custom_call.1} parent=1 // pred_check_branch
      %26 = sbr.rel (0) target = $region13
    $region12: #{tpu_custom_call.1} parent=1 // pred_region
      _
    $region13: #{tpu_custom_call.1} parent=1 // pred_fallthru
      _
    // Predicated region
    $region14: #{tpu_custom_call.1} parent=1 // pred_check
      _
    $region15: #{tpu_custom_call.1} parent=1 // pred_check_branch
      %28 = sbr.rel (0) target = $region17
    $region16: #{tpu_custom_call.1} parent=1 // pred_region
      %30 = dma.done [#allocation3], 256
    $region17: #{tpu_custom_call.1} parent=1 // pred_fallthru
      _
    %v31 = vld [vmem:[%s1] sm:$0xff]
    %v32 = vld [vmem:[#allocation2] sm:$0xff]
    %v33 = vld [vmem:[#allocation2 + $0x8] sm:$0xff]
    %v34 = vld [vmem:[%s2] sm:$0xff]
    %36 = vset.pattern.permute.xlu0 0
    %37 = vperm.xlu0 %36, %v34
    %v38 = vpop.permute.xlu0 %37
    %vm40 = vcmask 261120
    %v42 = vsel %vm40, %v31, 0
    %v45 = vsel %vm40, %v32, 0
    %v48 = vsel %vm40, %v33, 0
    %50 = vmatpush.xpose.msra.mxu0 0.0
    %51 = vmatpush.xpose.msra.mxu0 0.0
    %52 = vmatpush.xpose.msra.mxu0 0.0
    %53 = vmatpush.xpose.msra.mxu0 0.0
    %54 = vmatpush.xpose.msra.mxu0 0.0
    %55 = vmatpush.xpose.msra.mxu0 0.0
    %56 = vmatpush.xpose.msra.mxu0 0.0
    %57 = vmatpush.xpose.msra.mxu0 0.0
    %58 = vmatpush.xpose.msra.mxu0 0.0
    %59 = vmatpush.xpose.msra.mxu0 0.0
    %60 = vmatpush.xpose.msra.mxu0 0.0
    %61 = vmatpush.xpose.msra.mxu0 0.0
    %62 = vmatpush.xpose.msra.mxu0 0.0
    %63 = vmatpush.xpose.msra.mxu0 0.0
    %64 = vmatpush.xpose.msra.mxu0 %v48
    %65 = vmatpush.xpose.msra.mxu0 %v45
    %66 = vmatmul.f32.gmra.mxu0 %v42
    %v67 = vpop.f32.mrf.mxu0
    %v68 = vadd.f32 %v38, %v67
    %69 = vdwg.mxu0
    %vm70 = vcmask 130048
    %71 = vst.msk [vmem:[#allocation5] sm:$0xff] %vm70, %v68
    // Predicated region
    $region18: #{tpu_custom_call.1} parent=1 // pred_check
      _
    $region19: #{tpu_custom_call.1} parent=1 // pred_check_branch
      %73 = sbr.rel (0) target = $region21
    $region20: #{tpu_custom_call.1} parent=1 // pred_region
      %75 = vsyncadd [#allocation4], 0
      %s77 = sshll.u32 [#allocation5], 4
      %s78 = int_to_ptr.vmem [resolvable:$true] %s77
      %s79 = sshll.u32 %s3, 4
      %s80 = int_to_ptr.hbm [resolvable:$true] %s79
      %82 = dma.vmem_to_hbm [thread:$0]  %s78, 128, %s80, [#allocation4]
    $region21: #{tpu_custom_call.1} parent=1 // pred_fallthru
      _
    // Predicated region
    $region22: #{tpu_custom_call.1} parent=1 // pred_check
      _
    $region23: #{tpu_custom_call.1} parent=1 // pred_check_branch
      %84 = sbr.rel (0) target = $region25
    $region24: #{tpu_custom_call.1} parent=1 // pred_region
      %86 = dma.done [#allocation4], 128
    $region25: #{tpu_custom_call.1} parent=1 // pred_fallthru
      _
    %87 = vsyncpa [#allocation3], 1
    %88 = vsyncpa [#allocation4], 1

</llo_original>
